<compile_context>
chip_gen: v7x
topology: tpu7x:2x2x1
jax: 0.10.0
libtpu: 0.0.40
codegen_flags: <defaults>
</compile_context>

<pallas_src>
import functools

import jax
import jax.numpy as jnp
from jax.experimental import pallas as pl
from jax.experimental.pallas import tpu as pltpu


_LANE = 128
_SUBLANE = 8
_BN_EPS = 1e-5
_LEAKY_SLOPE = 0.01


def _round_up(x: int, m: int) -> int:
    return ((x + m - 1) // m) * m


# ----------------------------------------------------------------------------
# Fused MLP kernel: the whole network in one kernel, one packed param buffer.
#
# Packed parameter layout (per layer li), buffer shape (L, d_pad + 8, d_pad):
#   p_ref[li, 0:d_pad, :]     = W_li   (in-dim padded to d_pad rows,
#                                       out-dim padded to d_pad lanes)
#   p_ref[li, d_pad + 0, :]   = bias_li
#   p_ref[li, d_pad + 1, :]   = gamma_li  (hidden layers only, else 0)
#   p_ref[li, d_pad + 2, :]   = beta_li   (hidden layers only, else 0)
#   remaining rows            = sublane padding (zeros)
# ----------------------------------------------------------------------------
def _make_fused_mlp_kernel(n_layers: int, d_pad: int, b_pad: int, b_real: int):
    use_mask = b_pad != b_real
    inv_b = 1.0 / float(b_real)

    def kernel(x_ref, p_ref, o_ref):
        h = x_ref[...].astype(jnp.float32)

        if use_mask:
            # Hoisted once: 0/1 column mask of real batch rows.
            row_ids = jax.lax.broadcasted_iota(jnp.int32, (b_pad, 1), 0)
            row_mask = (row_ids < b_real).astype(jnp.float32)

        for li in range(n_layers):                      # unrolled at trace time
            w = p_ref[li, 0:d_pad, :]                   # (d_pad, d_pad) view
            b = p_ref[li, d_pad:d_pad + 1, :]           # (1, d_pad) view
            # Linear on the MXU.
            h = jnp.dot(h, w, preferred_element_type=jnp.float32) + b

            if li < n_layers - 1:
                gamma = p_ref[li, d_pad + 1:d_pad + 2, :]
                beta = p_ref[li, d_pad + 2:d_pad + 3, :]
                # BatchNorm1d (training mode, biased batch variance),
                # single-pass stats; gamma folded into the rsqrt scale.
                if use_mask:
                    hm = h * row_mask                    # zero out pad rows
                    mean = jnp.sum(hm, axis=0, keepdims=True) * inv_b
                    e_h2 = jnp.sum(hm * h, axis=0, keepdims=True) * inv_b
                else:
                    mean = jnp.mean(h, axis=0, keepdims=True)
                    e_h2 = jnp.mean(h * h, axis=0, keepdims=True)
                var = e_h2 - mean * mean
                scale = gamma * jax.lax.rsqrt(var + _BN_EPS)
                h = (h - mean) * scale + beta
                # leaky_relu, default negative_slope = 0.01
                h = jnp.where(h >= 0.0, h, _LEAKY_SLOPE * h)

        o_ref[...] = h.astype(o_ref.dtype)              # lane-dense store

    return kernel


# ----------------------------------------------------------------------------
# Jitted forward: pad input to lane/sublane alignment, run the single fused
# pallas_call, slice the real output rows/columns.
# ----------------------------------------------------------------------------
@functools.partial(
    jax.jit,
    static_argnames=("input_dim", "output_dim", "n_layers", "d_pad"),
)
def _fcnn_forward_impl(x, packed, *, input_dim, output_dim, n_layers, d_pad):
    batch = x.shape[0]
    b_pad = _round_up(max(batch, _SUBLANE), _SUBLANE)
    x_pad = jnp.pad(x, ((0, b_pad - batch), (0, d_pad - input_dim)))

    vmem = pl.BlockSpec(memory_space=pltpu.MemorySpace.VMEM)
    out_pad = pl.pallas_call(
        _make_fused_mlp_kernel(n_layers, d_pad, b_pad, batch),
        out_shape=jax.ShapeDtypeStruct((b_pad, d_pad), x.dtype),
        in_specs=[vmem, vmem],
        out_specs=vmem,
    )(x_pad, packed)
    return out_pad[:batch, :output_dim]


def fully_connected_forward(x, layers, input_dim, output_dim):
    """Equivalent of FullyConnectedNeuralNetwork.forward (train-mode BN)."""
    n_layers = len(layers)
    max_dim = max([input_dim, output_dim] + [l["w"].shape[1] for l in layers])
    d_pad = _round_up(max_dim, _LANE)
    packed = _pack_params(layers, d_pad)
    return _fcnn_forward_impl(
        x, packed,
        input_dim=input_dim, output_dim=output_dim,
        n_layers=n_layers, d_pad=d_pad,
    )


# ----------------------------------------------------------------------------
# Parameter construction (PyTorch nn.Linear-style init) + packing.
# ----------------------------------------------------------------------------
def init_fcnn_params(key, input_dim, output_dim, hidden_sizes, dtype=jnp.float32):
    layer_sizes = [input_dim] + list(hidden_sizes) + [output_dim]
    layers = []
    for li, (d_in, d_out) in enumerate(zip(layer_sizes[:-1], layer_sizes[1:])):
        key, kw, kb, kg, kbe = jax.random.split(key, 5)
        bound = 1.0 / (d_in ** 0.5)
        w = jax.random.uniform(kw, (d_in, d_out), dtype, -bound, bound)
        b = jax.random.uniform(kb, (d_out,), dtype, -bound, bound)
        layer = {"w": w, "b": b}
        if li < len(layer_sizes) - 2:
            # BatchNorm affine params (PyTorch default gamma=1, beta=0;
            # small perturbation so the affine path is exercised numerically).
            layer["gamma"] = 1.0 + 0.1 * jax.random.normal(kg, (d_out,), dtype)
            layer["beta"] = 0.1 * jax.random.normal(kbe, (d_out,), dtype)
        layers.append(layer)
    return layers


def _pack_params(layers, d_pad, dtype=jnp.float32):
    n_layers = len(layers)
    rows = d_pad + 8  # W rows + [bias, gamma, beta] rows + sublane padding
    buf = jnp.zeros((n_layers, rows, d_pad), dtype)
    for li, layer in enumerate(layers):
        d_in, d_out = layer["w"].shape
        buf = buf.at[li, :d_in, :d_out].set(layer["w"])
        buf = buf.at[li, d_pad, :d_out].set(layer["b"])
        if "gamma" in layer:
            buf = buf.at[li, d_pad + 1, :d_out].set(layer["gamma"])
            buf = buf.at[li, d_pad + 2, :d_out].set(layer["beta"])
    return buf


# ----------------------------------------------------------------------------
# Pure-JAX reference (PyTorch two-pass BN formulation) for sanity checking.
# ----------------------------------------------------------------------------
def _reference_forward(x, layers):
    h = x
    n = len(layers)
    for li, layer in enumerate(layers):
        h = h @ layer["w"] + layer["b"]
        if li < n - 1:
            mean = jnp.mean(h, axis=0, keepdims=True)
            var = jnp.mean((h - mean) ** 2, axis=0, keepdims=True)
            h = (h - mean) / jnp.sqrt(var + _BN_EPS)
            h = h * layer["gamma"] + layer["beta"]
            h = jnp.where(h >= 0.0, h, _LEAKY_SLOPE * h)
    return h


if __name__ == "__main__":
    # Small shapes consistent with the module.
    B = 8
    input_dim = 32
    hidden_sizes = [16, 8]
    output_dim = 4

    key = jax.random.PRNGKey(0)
    key, kx = jax.random.split(key)
    x = jax.random.normal(kx, (B, input_dim), jnp.float32)

    layers = init_fcnn_params(key, input_dim, output_dim, hidden_sizes)

    out = fully_connected_forward(x, layers, input_dim, output_dim)
    out = jax.block_until_ready(out)

    ref = _reference_forward(x, layers)
    assert out.shape == (B, output_dim), out.shape
    assert jnp.allclose(out, ref, atol=1e-4, rtol=1e-4), (out, ref)

    # Also exercise a batch that is not a sublane multiple (masked-BN path).
    key, kx2 = jax.random.split(key)
    x2 = jax.random.normal(kx2, (5, input_dim), jnp.float32)
    out2 = jax.block_until_ready(
        fully_connected_forward(x2, layers, input_dim, output_dim))
    ref2 = _reference_forward(x2, layers)
    assert out2.shape == (5, output_dim), out2.shape
    assert jnp.allclose(out2, ref2, atol=1e-4, rtol=1e-4), (out2, ref2)

    print("KERNEL_OK")
</pallas_src>

<mosaic_0001>
module attributes {stable_mosaic.version = 11 : i64} {
  func.func @kernel(%arg0: memref<8x128xf32, #tpu.memory_space<vmem>>, %arg1: memref<3x136x128xf32, #tpu.memory_space<vmem>>, %arg2: memref<8x128xf32, #tpu.memory_space<vmem>>) attributes {dimension_semantics = [], scalar_prefetch = 0 : i64, scratch_operands = 0 : i64, tpu.core_type = #tpu.core_type<tc>} {
    %c0 = arith.constant 0 : index
    %c0_0 = arith.constant 0 : index
    %0 = vector.load %arg0[%c0, %c0_0] : memref<8x128xf32, #tpu.memory_space<vmem>>, vector<8x128xf32>
    %c0_1 = arith.constant 0 : index
    %c0_2 = arith.constant 0 : index
    %c0_3 = arith.constant 0 : index
    %1 = vector.load %arg1[%c0_1, %c0_2, %c0_3] : memref<3x136x128xf32, #tpu.memory_space<vmem>>, vector<1x128x128xf32>
    %2 = vector.shape_cast %1 : vector<1x128x128xf32> to vector<128x128xf32>
    %c0_4 = arith.constant 0 : index
    %c128 = arith.constant 128 : index
    %c0_5 = arith.constant 0 : index
    %3 = vector.load %arg1[%c0_4, %c128, %c0_5] : memref<3x136x128xf32, #tpu.memory_space<vmem>>, vector<1x1x128xf32>
    %4 = vector.shape_cast %3 : vector<1x1x128xf32> to vector<1x128xf32>
    %cst = arith.constant dense<0.000000e+00> : vector<8x128xf32>
    %5 = tpu.matmul %0, %2, %cst {dimension_numbers = #tpu.dot_dimension_numbers<[1], [0], [0], [1], [0, 0, 1, 1], [], []>} : vector<8x128xf32>, vector<128x128xf32>, vector<8x128xf32> -> vector<8x128xf32>
    %6 = vector.broadcast %4 : vector<1x128xf32> to vector<8x128xf32>
    %7 = arith.addf %5, %6 : vector<8x128xf32>
    %c0_6 = arith.constant 0 : index
    %c129 = arith.constant 129 : index
    %c0_7 = arith.constant 0 : index
    %8 = vector.load %arg1[%c0_6, %c129, %c0_7] : memref<3x136x128xf32, #tpu.memory_space<vmem>>, vector<1x1x128xf32>
    %9 = vector.shape_cast %8 : vector<1x1x128xf32> to vector<1x128xf32>
    %c0_8 = arith.constant 0 : index
    %c130 = arith.constant 130 : index
    %c0_9 = arith.constant 0 : index
    %10 = vector.load %arg1[%c0_8, %c130, %c0_9] : memref<3x136x128xf32, #tpu.memory_space<vmem>>, vector<1x1x128xf32>
    %11 = vector.shape_cast %10 : vector<1x1x128xf32> to vector<1x128xf32>
    %cst_10 = arith.constant dense<0.000000e+00> : vector<128xf32>
    %12 = vector.multi_reduction <add>, %7, %cst_10 [0] : vector<8x128xf32> to vector<128xf32>
    %13 = vector.shape_cast %12 : vector<128xf32> to vector<1x128xf32>
    %cst_11 = arith.constant 8.000000e+00 : f32
    %14 = vector.broadcast %cst_11 : f32 to vector<1x128xf32>
    %15 = arith.divf %13, %14 : vector<1x128xf32>
    %16 = arith.mulf %7, %7 : vector<8x128xf32>
    %cst_12 = arith.constant dense<0.000000e+00> : vector<128xf32>
    %17 = vector.multi_reduction <add>, %16, %cst_12 [0] : vector<8x128xf32> to vector<128xf32>
    %18 = vector.shape_cast %17 : vector<128xf32> to vector<1x128xf32>
    %cst_13 = arith.constant 8.000000e+00 : f32
    %19 = vector.broadcast %cst_13 : f32 to vector<1x128xf32>
    %20 = arith.divf %18, %19 : vector<1x128xf32>
    %21 = arith.mulf %15, %15 : vector<1x128xf32>
    %22 = arith.subf %20, %21 : vector<1x128xf32>
    %cst_14 = arith.constant 9.99999974E-6 : f32
    %23 = vector.broadcast %cst_14 : f32 to vector<1x128xf32>
    %24 = arith.addf %22, %23 : vector<1x128xf32>
    %25 = math.rsqrt %24 : vector<1x128xf32>
    %26 = arith.mulf %9, %25 : vector<1x128xf32>
    %27 = vector.broadcast %15 : vector<1x128xf32> to vector<8x128xf32>
    %28 = arith.subf %7, %27 : vector<8x128xf32>
    %29 = vector.broadcast %26 : vector<1x128xf32> to vector<8x128xf32>
    %30 = arith.mulf %28, %29 : vector<8x128xf32>
    %31 = vector.broadcast %11 : vector<1x128xf32> to vector<8x128xf32>
    %32 = arith.addf %30, %31 : vector<8x128xf32>
    %cst_15 = arith.constant 0.000000e+00 : f32
    %33 = vector.broadcast %cst_15 : f32 to vector<8x128xf32>
    %34 = arith.cmpf oge, %32, %33 : vector<8x128xf32>
    %cst_16 = arith.constant 0.00999999977 : f32
    %35 = vector.broadcast %cst_16 : f32 to vector<8x128xf32>
    %36 = arith.mulf %35, %32 : vector<8x128xf32>
    %37 = arith.select %34, %32, %36 : vector<8x128xi1>, vector<8x128xf32>
    %c1 = arith.constant 1 : index
    %c0_17 = arith.constant 0 : index
    %c0_18 = arith.constant 0 : index
    %38 = vector.load %arg1[%c1, %c0_17, %c0_18] : memref<3x136x128xf32, #tpu.memory_space<vmem>>, vector<1x128x128xf32>
    %39 = vector.shape_cast %38 : vector<1x128x128xf32> to vector<128x128xf32>
    %c1_19 = arith.constant 1 : index
    %c128_20 = arith.constant 128 : index
    %c0_21 = arith.constant 0 : index
    %40 = vector.load %arg1[%c1_19, %c128_20, %c0_21] : memref<3x136x128xf32, #tpu.memory_space<vmem>>, vector<1x1x128xf32>
    %41 = vector.shape_cast %40 : vector<1x1x128xf32> to vector<1x128xf32>
    %cst_22 = arith.constant dense<0.000000e+00> : vector<8x128xf32>
    %42 = tpu.matmul %37, %39, %cst_22 {dimension_numbers = #tpu.dot_dimension_numbers<[1], [0], [0], [1], [0, 0, 1, 1], [], []>} : vector<8x128xf32>, vector<128x128xf32>, vector<8x128xf32> -> vector<8x128xf32>
    %43 = vector.broadcast %41 : vector<1x128xf32> to vector<8x128xf32>
    %44 = arith.addf %42, %43 : vector<8x128xf32>
    %c1_23 = arith.constant 1 : index
    %c129_24 = arith.constant 129 : index
    %c0_25 = arith.constant 0 : index
    %45 = vector.load %arg1[%c1_23, %c129_24, %c0_25] : memref<3x136x128xf32, #tpu.memory_space<vmem>>, vector<1x1x128xf32>
    %46 = vector.shape_cast %45 : vector<1x1x128xf32> to vector<1x128xf32>
    %c1_26 = arith.constant 1 : index
    %c130_27 = arith.constant 130 : index
    %c0_28 = arith.constant 0 : index
    %47 = vector.load %arg1[%c1_26, %c130_27, %c0_28] : memref<3x136x128xf32, #tpu.memory_space<vmem>>, vector<1x1x128xf32>
    %48 = vector.shape_cast %47 : vector<1x1x128xf32> to vector<1x128xf32>
    %cst_29 = arith.constant dense<0.000000e+00> : vector<128xf32>
    %49 = vector.multi_reduction <add>, %44, %cst_29 [0] : vector<8x128xf32> to vector<128xf32>
    %50 = vector.shape_cast %49 : vector<128xf32> to vector<1x128xf32>
    %cst_30 = arith.constant 8.000000e+00 : f32
    %51 = vector.broadcast %cst_30 : f32 to vector<1x128xf32>
    %52 = arith.divf %50, %51 : vector<1x128xf32>
    %53 = arith.mulf %44, %44 : vector<8x128xf32>
    %cst_31 = arith.constant dense<0.000000e+00> : vector<128xf32>
    %54 = vector.multi_reduction <add>, %53, %cst_31 [0] : vector<8x128xf32> to vector<128xf32>
    %55 = vector.shape_cast %54 : vector<128xf32> to vector<1x128xf32>
    %cst_32 = arith.constant 8.000000e+00 : f32
    %56 = vector.broadcast %cst_32 : f32 to vector<1x128xf32>
    %57 = arith.divf %55, %56 : vector<1x128xf32>
    %58 = arith.mulf %52, %52 : vector<1x128xf32>
    %59 = arith.subf %57, %58 : vector<1x128xf32>
    %cst_33 = arith.constant 9.99999974E-6 : f32
    %60 = vector.broadcast %cst_33 : f32 to vector<1x128xf32>
    %61 = arith.addf %59, %60 : vector<1x128xf32>
    %62 = math.rsqrt %61 : vector<1x128xf32>
    %63 = arith.mulf %46, %62 : vector<1x128xf32>
    %64 = vector.broadcast %52 : vector<1x128xf32> to vector<8x128xf32>
    %65 = arith.subf %44, %64 : vector<8x128xf32>
    %66 = vector.broadcast %63 : vector<1x128xf32> to vector<8x128xf32>
    %67 = arith.mulf %65, %66 : vector<8x128xf32>
    %68 = vector.broadcast %48 : vector<1x128xf32> to vector<8x128xf32>
    %69 = arith.addf %67, %68 : vector<8x128xf32>
    %cst_34 = arith.constant 0.000000e+00 : f32
    %70 = vector.broadcast %cst_34 : f32 to vector<8x128xf32>
    %71 = arith.cmpf oge, %69, %70 : vector<8x128xf32>
    %cst_35 = arith.constant 0.00999999977 : f32
    %72 = vector.broadcast %cst_35 : f32 to vector<8x128xf32>
    %73 = arith.mulf %72, %69 : vector<8x128xf32>
    %74 = arith.select %71, %69, %73 : vector<8x128xi1>, vector<8x128xf32>
    %c2 = arith.constant 2 : index
    %c0_36 = arith.constant 0 : index
    %c0_37 = arith.constant 0 : index
    %75 = vector.load %arg1[%c2, %c0_36, %c0_37] : memref<3x136x128xf32, #tpu.memory_space<vmem>>, vector<1x128x128xf32>
    %76 = vector.shape_cast %75 : vector<1x128x128xf32> to vector<128x128xf32>
    %c2_38 = arith.constant 2 : index
    %c128_39 = arith.constant 128 : index
    %c0_40 = arith.constant 0 : index
    %77 = vector.load %arg1[%c2_38, %c128_39, %c0_40] : memref<3x136x128xf32, #tpu.memory_space<vmem>>, vector<1x1x128xf32>
    %78 = vector.shape_cast %77 : vector<1x1x128xf32> to vector<1x128xf32>
    %cst_41 = arith.constant dense<0.000000e+00> : vector<8x128xf32>
    %79 = tpu.matmul %74, %76, %cst_41 {dimension_numbers = #tpu.dot_dimension_numbers<[1], [0], [0], [1], [0, 0, 1, 1], [], []>} : vector<8x128xf32>, vector<128x128xf32>, vector<8x128xf32> -> vector<8x128xf32>
    %80 = vector.broadcast %78 : vector<1x128xf32> to vector<8x128xf32>
    %81 = arith.addf %79, %80 : vector<8x128xf32>
    %c0_42 = arith.constant 0 : index
    %c0_43 = arith.constant 0 : index
    %82 = vector.load %arg2[%c0_42, %c0_43] : memref<8x128xf32, #tpu.memory_space<vmem>>, vector<8x128xf32>
    tpu.vector_store %arg2[%c0_42, %c0_43], %81 {strides = array<i32>} : memref<8x128xf32, #tpu.memory_space<vmem>>, vector<8x128xf32>,
    return
  }
}

</mosaic_0001>

<llo_original>
// kernel: _fcnn_forward_impl.1
$region0: #{_fcnn_forward_impl.1}
  #allocation0 [shape = 'u32[]', space=smem, size = 0x4, offset = 0x4, fixed_abs, tag = 'smem constant byte address 0x4 - core index']
  #allocation1 [shape = 'u32[144,128]{1,0:T(1,128)}', space=vmem, size = 0x12000, scoped, tag = 'internal scratch']
  %s0 = inlined_call_operand.vmem [shape: f32[8,128], index: 0, kind: input, shape index: {}]
  %s1 = inlined_call_operand.hbm [shape: f32[3,136,128], index: 1, kind: input, shape index: {}]
  %s2 = inlined_call_operand.vmem [shape: f32[8,128], index: 2, kind: output, shape index: {}]
  %s3 = sld [smem:[#allocation0]]
  $region22: #{_fcnn_forward_impl.1} parent=0
    _
  %s5 = ssub.s32 1, %s3
  %s6 = scalar_select 0, %s5, %s3
  $region1: #{_fcnn_forward_impl.1} parent=0
    #allocation2 [shape = 'u8[208896]{0}', space=vmem, size = 0x33000, scoped, tag = 'input window, operand 1, single buffered']
    #allocation3 [shape = 's32[1]{0}', space=sflag, size = 0x4, scoped, tag = 'scoped memory for _fcnn_forward_impl.1']
    %7 = vsyncpa [#allocation3], 0
    // Predicated region
    $region2: #{_fcnn_forward_impl.1} parent=1 // pred_check
      _
    $region3: #{_fcnn_forward_impl.1} parent=1 // pred_check_branch
      %9 = sbr.rel (0) target = $region5
    $region4: #{_fcnn_forward_impl.1} parent=1 // pred_region
      _
    $region5: #{_fcnn_forward_impl.1} parent=1 // pred_fallthru
      _
    // Predicated region
    $region6: #{_fcnn_forward_impl.1} parent=1 // pred_check
      _
    $region7: #{_fcnn_forward_impl.1} parent=1 // pred_check_branch
      %11 = sbr.rel (0) target = $region9
    $region8: #{_fcnn_forward_impl.1} parent=1 // pred_region
      %s13 = ssub.s32 6528, 6528
      %14 = vsyncadd [#allocation3], %s13
      %s15 = sshll.u32 [#allocation2], 4
      %s16 = int_to_ptr.vmem [resolvable:$true] %s15
      %21 = dma.hbm_to_vmem [thread:$0]  %s1, 6528, %s16, [#allocation3], 128, 128, 8
    $region9: #{_fcnn_forward_impl.1} parent=1 // pred_fallthru
      _
    // Predicated region
    $region10: #{_fcnn_forward_impl.1} parent=1 // pred_check
      _
    $region11: #{_fcnn_forward_impl.1} parent=1 // pred_check_branch
      %23 = sbr.rel (0) target = $region13
    $region12: #{_fcnn_forward_impl.1} parent=1 // pred_region
      %24 = dma.done [#allocation3], 6528
    $region13: #{_fcnn_forward_impl.1} parent=1 // pred_fallthru
      _
    %v25 = vld [vmem:[%s0] sm:$0xff]
    %v26 = vld [vmem:[#allocation2] sm:$0xff]
    %v27 = vld [vmem:[#allocation2 + $0x8] sm:$0xff]
    %v28 = vld [vmem:[#allocation2 + $0x10] sm:$0xff]
    %v29 = vld [vmem:[#allocation2 + $0x18] sm:$0xff]
    %v30 = vld [vmem:[#allocation2 + $0x20] sm:$0xff]
    %v31 = vld [vmem:[#allocation2 + $0x28] sm:$0xff]
    %v32 = vld [vmem:[#allocation2 + $0x30] sm:$0xff]
    %v33 = vld [vmem:[#allocation2 + $0x38] sm:$0xff]
    %v34 = vld [vmem:[#allocation2 + $0x40] sm:$0xff]
    %v35 = vld [vmem:[#allocation2 + $0x48] sm:$0xff]
    %v36 = vld [vmem:[#allocation2 + $0x50] sm:$0xff]
    %v37 = vld [vmem:[#allocation2 + $0x58] sm:$0xff]
    %v38 = vld [vmem:[#allocation2 + $0x60] sm:$0xff]
    %v39 = vld [vmem:[#allocation2 + $0x68] sm:$0xff]
    %v40 = vld [vmem:[#allocation2 + $0x70] sm:$0xff]
    %v41 = vld [vmem:[#allocation2 + $0x78] sm:$0xff]
    %v42 = vld [vmem:[#allocation2 + $0x80] sm:$0x1]
    %v43 = vlaneseq
    %v44 = vshrl.u32 %v43, 7
    %v45 = vsub.s32 0, %v44
    %v46 = vrot.slane %v42, %v45
    %47 = vmatprep.subr.mxu0 0.0
    %48 = vmatpush1.msra.mxu0 %v26
    %49 = vmatprep.subr.mxu0 0.0
    %50 = vmatpush1.msra.mxu0 %v27
    %51 = vmatprep.subr.mxu0 0.0
    %52 = vmatpush1.msra.mxu0 %v28
    %53 = vmatprep.subr.mxu0 0.0
    %54 = vmatpush1.msra.mxu0 %v29
    %55 = vmatprep.subr.mxu0 0.0
    %56 = vmatpush1.msra.mxu0 %v30
    %57 = vmatprep.subr.mxu0 0.0
    %58 = vmatpush1.msra.mxu0 %v31
    %59 = vmatprep.subr.mxu0 0.0
    %60 = vmatpush1.msra.mxu0 %v32
    %61 = vmatprep.subr.mxu0 0.0
    %62 = vmatpush1.msra.mxu0 %v33
    %63 = vmatprep.subr.mxu0 0.0
    %64 = vmatpush1.msra.mxu0 %v34
    %65 = vmatprep.subr.mxu0 0.0
    %66 = vmatpush1.msra.mxu0 %v35
    %67 = vmatprep.subr.mxu0 0.0
    %68 = vmatpush1.msra.mxu0 %v36
    %69 = vmatprep.subr.mxu0 0.0
    %70 = vmatpush1.msra.mxu0 %v37
    %71 = vmatprep.subr.mxu0 0.0
    %72 = vmatpush1.msra.mxu0 %v38
    %73 = vmatprep.subr.mxu0 0.0
    %74 = vmatpush1.msra.mxu0 %v39
    %75 = vmatprep.subr.mxu0 0.0
    %76 = vmatpush1.msra.mxu0 %v40
    %77 = vmatprep.subr.mxu0 0.0
    %78 = vmatpush1.msra.mxu0 %v41
    %79 = vmatprep.subr.mxu0 0.0
    %80 = vmatpush1.msra.mxu0 0.0
    %81 = vmatprep.subr.mxu0 0.0
    %82 = vmatpush1.msra.mxu0 0.0
    %83 = vmatprep.subr.mxu0 0.0
    %84 = vmatpush1.msra.mxu0 0.0
    %85 = vmatprep.subr.mxu0 0.0
    %86 = vmatpush1.msra.mxu0 0.0
    %87 = vmatprep.subr.mxu0 0.0
    %88 = vmatpush1.msra.mxu0 0.0
    %89 = vmatprep.subr.mxu0 0.0
    %90 = vmatpush1.msra.mxu0 0.0
    %91 = vmatprep.subr.mxu0 0.0
    %92 = vmatpush1.msra.mxu0 0.0
    %93 = vmatprep.subr.mxu0 0.0
    %94 = vmatpush1.msra.mxu0 0.0
    %95 = vmatprep.subr.mxu0 0.0
    %96 = vmatpush1.msra.mxu0 0.0
    %97 = vmatprep.subr.mxu0 0.0
    %98 = vmatpush1.msra.mxu0 0.0
    %99 = vmatprep.subr.mxu0 0.0
    %100 = vmatpush1.msra.mxu0 0.0
    %101 = vmatprep.subr.mxu0 0.0
    %102 = vmatpush1.msra.mxu0 0.0
    %103 = vmatprep.subr.mxu0 0.0
    %104 = vmatpush1.msra.mxu0 0.0
    %105 = vmatprep.subr.mxu0 0.0
    %106 = vmatpush1.msra.mxu0 0.0
    %107 = vmatprep.subr.mxu0 0.0
    %108 = vmatpush1.msra.mxu0 0.0
    %109 = vmatprep.subr.mxu0 0.0
    %110 = vmatpush1.msra.mxu0 0.0
    %111 = vmatprep.mubr.f32.mxu0 0.0
    %112 = vmatmul.mubr.f32.gmra.mrb[0].mxu0 %v25
    %v113 = vpop.f32.mrb[0].mxu0
    %v114 = vadd.f32 %v46, %v113
    %v115 = vpop.f32.mrb[0].mxu0
    %116 = vdwg.mxu0
    %v117 = vld [vmem:[#allocation2 + $0x81] sm:$0x1]
    %v118 = vld [vmem:[#allocation2 + $0x82] sm:$0x1]
    %v119 = vrot.slane %v114, 4
    %v120 = vadd.f32 %v114, %v119
    %v121 = vrot.slane %v120, 2
    %v122 = vadd.f32 %v120, %v121
    %v123 = vrot.slane %v122, 1
    %v124 = vadd.f32 %v122, %v123
    %v125 = vrcp.pop 8.0
    %v126 = vmul.f32 %v124, %v125
    %v127 = vmul.f32 %v114, %v114
    %v128 = vrot.slane %v127, 4
    %v129 = vadd.f32 %v127, %v128
    %v130 = vrot.slane %v129, 2
    %v131 = vadd.f32 %v129, %v130
    %v132 = vrot.slane %v131, 1
    %v133 = vadd.f32 %v131, %v132
    %v134 = vmul.f32 %v133, %v125
    %v135 = vmul.f32 %v126, %v126
    %v136 = vsub.f32 %v134, %v135
    %v137 = vadd.f32 %v136, 1e-05
    %v138 = vrsqrt.pop %v137
    %v139 = vmul.f32 %v117, %v138
    %v140 = vsub.f32 %v114, %v126
    %v141 = vlaneseq
    %v142 = vshrl.u32 %v141, 7
    %v143 = vsub.s32 0, %v142
    %v144 = vrot.slane %v139, %v143
    %v145 = vmul.f32 %v140, %v144
    %v146 = vlaneseq
    %v147 = vshrl.u32 %v146, 7
    %v148 = vsub.s32 0, %v147
    %v149 = vrot.slane %v118, %v148
    %v150 = vadd.f32 %v145, %v149
    %vm151 = vcmp.ge.f32.partialorder %v150, 0.0
    %v152 = vmul.f32 %v150, 0.01
    %v153 = vsel %vm151, %v150, %v152
    %s154 = scalar_lea.vmem [#allocation2], 136
    %v155 = vld [vmem:[%s154] sm:$0xff]
    %v156 = vld [vmem:[%s154 + $0x8] sm:$0xff]
    %v157 = vld [vmem:[%s154 + $0x10] sm:$0xff]
    %v158 = vld [vmem:[%s154 + $0x18] sm:$0xff]
    %v159 = vld [vmem:[%s154 + $0x20] sm:$0xff]
    %v160 = vld [vmem:[%s154 + $0x28] sm:$0xff]
    %v161 = vld [vmem:[%s154 + $0x30] sm:$0xff]
    %v162 = vld [vmem:[%s154 + $0x38] sm:$0xff]
    %v163 = vld [vmem:[%s154 + $0x40] sm:$0xff]
    %v164 = vld [vmem:[%s154 + $0x48] sm:$0xff]
    %v165 = vld [vmem:[%s154 + $0x50] sm:$0xff]
    %v166 = vld [vmem:[%s154 + $0x58] sm:$0xff]
    %v167 = vld [vmem:[%s154 + $0x60] sm:$0xff]
    %v168 = vld [vmem:[%s154 + $0x68] sm:$0xff]
    %v169 = vld [vmem:[%s154 + $0x70] sm:$0xff]
    %v170 = vld [vmem:[%s154 + $0x78] sm:$0xff]
    %v171 = vld [vmem:[%s154 + $0x80] sm:$0x1]
    %v172 = vlaneseq
    %v173 = vshrl.u32 %v172, 7
    %v174 = vsub.s32 0, %v173
    %v175 = vrot.slane %v171, %v174
    %176 = vmatprep.subr.mxu0 0.0
    %177 = vmatpush1.msra.mxu0 %v155
    %178 = vmatprep.subr.mxu0 0.0
    %179 = vmatpush1.msra.mxu0 %v156
    %180 = vmatprep.subr.mxu0 0.0
    %181 = vmatpush1.msra.mxu0 %v157
    %182 = vmatprep.subr.mxu0 0.0
    %183 = vmatpush1.msra.mxu0 %v158
    %184 = vmatprep.subr.mxu0 0.0
    %185 = vmatpush1.msra.mxu0 %v159
    %186 = vmatprep.subr.mxu0 0.0
    %187 = vmatpush1.msra.mxu0 %v160
    %188 = vmatprep.subr.mxu0 0.0
    %189 = vmatpush1.msra.mxu0 %v161
    %190 = vmatprep.subr.mxu0 0.0
    %191 = vmatpush1.msra.mxu0 %v162
    %192 = vmatprep.subr.mxu0 0.0
    %193 = vmatpush1.msra.mxu0 %v163
    %194 = vmatprep.subr.mxu0 0.0
    %195 = vmatpush1.msra.mxu0 %v164
    %196 = vmatprep.subr.mxu0 0.0
    %197 = vmatpush1.msra.mxu0 %v165
    %198 = vmatprep.subr.mxu0 0.0
    %199 = vmatpush1.msra.mxu0 %v166
    %200 = vmatprep.subr.mxu0 0.0
    %201 = vmatpush1.msra.mxu0 %v167
    %202 = vmatprep.subr.mxu0 0.0
    %203 = vmatpush1.msra.mxu0 %v168
    %204 = vmatprep.subr.mxu0 0.0
    %205 = vmatpush1.msra.mxu0 %v169
    %206 = vmatprep.subr.mxu0 0.0
    %207 = vmatpush1.msra.mxu0 %v170
    %208 = vmatprep.subr.mxu0 0.0
    %209 = vmatpush1.msra.mxu0 0.0
    %210 = vmatprep.subr.mxu0 0.0
    %211 = vmatpush1.msra.mxu0 0.0
    %212 = vmatprep.subr.mxu0 0.0
    %213 = vmatpush1.msra.mxu0 0.0
    %214 = vmatprep.subr.mxu0 0.0
    %215 = vmatpush1.msra.mxu0 0.0
    %216 = vmatprep.subr.mxu0 0.0
    %217 = vmatpush1.msra.mxu0 0.0
    %218 = vmatprep.subr.mxu0 0.0
    %219 = vmatpush1.msra.mxu0 0.0
    %220 = vmatprep.subr.mxu0 0.0
    %221 = vmatpush1.msra.mxu0 0.0
    %222 = vmatprep.subr.mxu0 0.0
    %223 = vmatpush1.msra.mxu0 0.0
    %224 = vmatprep.subr.mxu0 0.0
    %225 = vmatpush1.msra.mxu0 0.0
    %226 = vmatprep.subr.mxu0 0.0
    %227 = vmatpush1.msra.mxu0 0.0
    %228 = vmatprep.subr.mxu0 0.0
    %229 = vmatpush1.msra.mxu0 0.0
    %230 = vmatprep.subr.mxu0 0.0
    %231 = vmatpush1.msra.mxu0 0.0
    %232 = vmatprep.subr.mxu0 0.0
    %233 = vmatpush1.msra.mxu0 0.0
    %234 = vmatprep.subr.mxu0 0.0
    %235 = vmatpush1.msra.mxu0 0.0
    %236 = vmatprep.subr.mxu0 0.0
    %237 = vmatpush1.msra.mxu0 0.0
    %238 = vmatprep.subr.mxu0 0.0
    %239 = vmatpush1.msra.mxu0 0.0
    %240 = vmatprep.mubr.f32.mxu0 0.0
    %241 = vmatmul.mubr.f32.gmra.mrb[0].mxu0 %v153
    %v242 = vpop.f32.mrb[0].mxu0
    %v243 = vadd.f32 %v175, %v242
    %v244 = vpop.f32.mrb[0].mxu0
    %245 = vdwg.mxu0
    %v246 = vld [vmem:[%s154 + $0x81] sm:$0x1]
    %v247 = vld [vmem:[%s154 + $0x82] sm:$0x1]
    %v248 = vrot.slane %v243, 4
    %v249 = vadd.f32 %v243, %v248
    %v250 = vrot.slane %v249, 2
    %v251 = vadd.f32 %v249, %v250
    %v252 = vrot.slane %v251, 1
    %v253 = vadd.f32 %v251, %v252
    %v254 = vmul.f32 %v253, %v125
    %v255 = vmul.f32 %v243, %v243
    %v256 = vrot.slane %v255, 4
    %v257 = vadd.f32 %v255, %v256
    %v258 = vrot.slane %v257, 2
    %v259 = vadd.f32 %v257, %v258
    %v260 = vrot.slane %v259, 1
    %v261 = vadd.f32 %v259, %v260
    %v262 = vmul.f32 %v261, %v125
    %v263 = vmul.f32 %v254, %v254
    %v264 = vsub.f32 %v262, %v263
    %v265 = vadd.f32 %v264, 1e-05
    %v266 = vrsqrt.pop %v265
    %v267 = vmul.f32 %v246, %v266
    %v268 = vsub.f32 %v243, %v254
    %v269 = vlaneseq
    %v270 = vshrl.u32 %v269, 7
    %v271 = vsub.s32 0, %v270
    %v272 = vrot.slane %v267, %v271
    %v273 = vmul.f32 %v268, %v272
    %v274 = vlaneseq
    %v275 = vshrl.u32 %v274, 7
    %v276 = vsub.s32 0, %v275
    %v277 = vrot.slane %v247, %v276
    %v278 = vadd.f32 %v273, %v277
    %vm279 = vcmp.ge.f32.partialorder %v278, 0.0
    %v280 = vmul.f32 %v278, 0.01
    %v281 = vsel %vm279, %v278, %v280
    %s282 = scalar_lea.vmem [#allocation2], 272
    %v283 = vld [vmem:[%s282] sm:$0xff]
    %v284 = vld [vmem:[%s282 + $0x8] sm:$0xff]
    %v285 = vld [vmem:[%s282 + $0x10] sm:$0xff]
    %v286 = vld [vmem:[%s282 + $0x18] sm:$0xff]
    %v287 = vld [vmem:[%s282 + $0x20] sm:$0xff]
    %v288 = vld [vmem:[%s282 + $0x28] sm:$0xff]
    %v289 = vld [vmem:[%s282 + $0x30] sm:$0xff]
    %v290 = vld [vmem:[%s282 + $0x38] sm:$0xff]
    %v291 = vld [vmem:[%s282 + $0x40] sm:$0xff]
    %v292 = vld [vmem:[%s282 + $0x48] sm:$0xff]
    %v293 = vld [vmem:[%s282 + $0x50] sm:$0xff]
    %v294 = vld [vmem:[%s282 + $0x58] sm:$0xff]
    %v295 = vld [vmem:[%s282 + $0x60] sm:$0xff]
    %v296 = vld [vmem:[%s282 + $0x68] sm:$0xff]
    %v297 = vld [vmem:[%s282 + $0x70] sm:$0xff]
    %v298 = vld [vmem:[%s282 + $0x78] sm:$0xff]
    %v299 = vld [vmem:[%s282 + $0x80] sm:$0x1]
    %v300 = vlaneseq
    %v301 = vshrl.u32 %v300, 7
    %v302 = vsub.s32 0, %v301
    %v303 = vrot.slane %v299, %v302
    %304 = vmatprep.subr.mxu0 0.0
    %305 = vmatpush1.msra.mxu0 %v283
    %306 = vmatprep.subr.mxu0 0.0
    %307 = vmatpush1.msra.mxu0 %v284
    %308 = vmatprep.subr.mxu0 0.0
    %309 = vmatpush1.msra.mxu0 %v285
    %310 = vmatprep.subr.mxu0 0.0
    %311 = vmatpush1.msra.mxu0 %v286
    %312 = vmatprep.subr.mxu0 0.0
    %313 = vmatpush1.msra.mxu0 %v287
    %314 = vmatprep.subr.mxu0 0.0
    %315 = vmatpush1.msra.mxu0 %v288
    %316 = vmatprep.subr.mxu0 0.0
    %317 = vmatpush1.msra.mxu0 %v289
    %318 = vmatprep.subr.mxu0 0.0
    %319 = vmatpush1.msra.mxu0 %v290
    %320 = vmatprep.subr.mxu0 0.0
    %321 = vmatpush1.msra.mxu0 %v291
    %322 = vmatprep.subr.mxu0 0.0
    %323 = vmatpush1.msra.mxu0 %v292
    %324 = vmatprep.subr.mxu0 0.0
    %325 = vmatpush1.msra.mxu0 %v293
    %326 = vmatprep.subr.mxu0 0.0
    %327 = vmatpush1.msra.mxu0 %v294
    %328 = vmatprep.subr.mxu0 0.0
    %329 = vmatpush1.msra.mxu0 %v295
    %330 = vmatprep.subr.mxu0 0.0
    %331 = vmatpush1.msra.mxu0 %v296
    %332 = vmatprep.subr.mxu0 0.0
    %333 = vmatpush1.msra.mxu0 %v297
    %334 = vmatprep.subr.mxu0 0.0
    %335 = vmatpush1.msra.mxu0 %v298
    %336 = vmatprep.subr.mxu0 0.0
    %337 = vmatpush1.msra.mxu0 0.0
    %338 = vmatprep.subr.mxu0 0.0
    %339 = vmatpush1.msra.mxu0 0.0
    %340 = vmatprep.subr.mxu0 0.0
    %341 = vmatpush1.msra.mxu0 0.0
    %342 = vmatprep.subr.mxu0 0.0
    %343 = vmatpush1.msra.mxu0 0.0
    %344 = vmatprep.subr.mxu0 0.0
    %345 = vmatpush1.msra.mxu0 0.0
    %346 = vmatprep.subr.mxu0 0.0
    %347 = vmatpush1.msra.mxu0 0.0
    %348 = vmatprep.subr.mxu0 0.0
    %349 = vmatpush1.msra.mxu0 0.0
    %350 = vmatprep.subr.mxu0 0.0
    %351 = vmatpush1.msra.mxu0 0.0
    %352 = vmatprep.subr.mxu0 0.0
    %353 = vmatpush1.msra.mxu0 0.0
    %354 = vmatprep.subr.mxu0 0.0
    %355 = vmatpush1.msra.mxu0 0.0
    %356 = vmatprep.subr.mxu0 0.0
    %357 = vmatpush1.msra.mxu0 0.0
    %358 = vmatprep.subr.mxu0 0.0
    %359 = vmatpush1.msra.mxu0 0.0
    %360 = vmatprep.subr.mxu0 0.0
    %361 = vmatpush1.msra.mxu0 0.0
    %362 = vmatprep.subr.mxu0 0.0
    %363 = vmatpush1.msra.mxu0 0.0
    %364 = vmatprep.subr.mxu0 0.0
    %365 = vmatpush1.msra.mxu0 0.0
    %366 = vmatprep.subr.mxu0 0.0
    %367 = vmatpush1.msra.mxu0 0.0
    %368 = vmatprep.mubr.f32.mxu0 0.0
    %369 = vmatmul.mubr.f32.gmra.mrb[0].mxu0 %v281
    %v370 = vpop.f32.mrb[0].mxu0
    %v371 = vadd.f32 %v303, %v370
    %v372 = vpop.f32.mrb[0].mxu0
    %373 = vdwg.mxu0
    %374 = vst [vmem:[%s2] sm:$0xff] %v371
    // Predicated region
    $region14: #{_fcnn_forward_impl.1} parent=1 // pred_check
      _
    $region15: #{_fcnn_forward_impl.1} parent=1 // pred_check_branch
      %376 = sbr.rel (0) target = $region17
    $region16: #{_fcnn_forward_impl.1} parent=1 // pred_region
      _
    $region17: #{_fcnn_forward_impl.1} parent=1 // pred_fallthru
      _
    // Predicated region
    $region18: #{_fcnn_forward_impl.1} parent=1 // pred_check
      _
    $region19: #{_fcnn_forward_impl.1} parent=1 // pred_check_branch
      %378 = sbr.rel (0) target = $region21
    $region20: #{_fcnn_forward_impl.1} parent=1 // pred_region
      _
    $region21: #{_fcnn_forward_impl.1} parent=1 // pred_fallthru
      _
    %379 = vsyncpa [#allocation3], 1

</llo_original>
